<compile_context>
chip_gen: v7x
topology: tpu7x:2x2x1
jax: 0.10.0
libtpu: 0.0.40
codegen_flags: <defaults>
</compile_context>

<pallas_src>
import functools

import jax
import jax.numpy as jnp
from jax.experimental import pallas as pl
from jax.experimental.pallas import tpu as pltpu


# ---------------------------------------------------------------------------
# Kernel
# ---------------------------------------------------------------------------
def dqn_kernel(x_ref,
               w1_ref, b1_ref, w2_ref, b2_ref, w3_ref, b3_ref,
               wh1_ref, bh1_ref, wh2_ref, bh2_ref,
               q_ref, *, action_dim: int):
    """One TILE_B x obs tile -> TILE_B x 128 (padded) dueling-Q tile."""
    f32 = jnp.float32
    cdt = w1_ref.dtype  # compute dtype for MXU inputs (bf16)

    def linear_relu(h, w_ref, b_ref):
        y = jnp.dot(h, w_ref[...], preferred_element_type=f32) + b_ref[...]
        return jnp.maximum(y, 0.0)

    x = x_ref[...].astype(cdt)

    # --- FCEncoder (third layer zero-padded 64 -> 128 lanes) ---
    h = linear_relu(x, w1_ref, b1_ref).astype(cdt)
    h = linear_relu(h, w2_ref, b2_ref).astype(cdt)
    h = linear_relu(h, w3_ref, b3_ref).astype(cdt)          # (TB, 128), cols 64.. == 0

    # --- fused DuelingHead ---
    hh = linear_relu(h, wh1_ref, bh1_ref).astype(cdt)        # (TB, 128) = [a_h | v_h]
    qa = jnp.dot(hh, wh2_ref[...], preferred_element_type=f32) + bh2_ref[...]
    # qa columns: [0, A) = advantage, A = value, rest = 0

    lane = jax.lax.broadcasted_iota(jnp.int32, qa.shape, dimension=1)
    a_mask = lane < action_dim
    a_mean = jnp.sum(jnp.where(a_mask, qa, 0.0), axis=-1, keepdims=True) * (1.0 / action_dim)
    v = jnp.sum(jnp.where(lane == action_dim, qa, 0.0), axis=-1, keepdims=True)

    q = jnp.where(a_mask, qa - a_mean + v, 0.0)
    q_ref[...] = q.astype(q_ref.dtype)


# ---------------------------------------------------------------------------
# Parameter construction / packing
# ---------------------------------------------------------------------------
def make_dqn_params(key, obs_dim, action_dim, hidden_list=(128, 128, 64)):
    """PyTorch-Linear-style init: U(-1/sqrt(fan_in), 1/sqrt(fan_in)); W stored (in, out)."""
    dims = [
        (obs_dim, hidden_list[0]),         # encoder layer 1
        (hidden_list[0], hidden_list[1]),  # encoder layer 2
        (hidden_list[1], hidden_list[2]),  # encoder layer 3
        (hidden_list[2], hidden_list[2]),  # head A hidden
        (hidden_list[2], action_dim),      # head A out
        (hidden_list[2], hidden_list[2]),  # head V hidden
        (hidden_list[2], 1),               # head V out
    ]
    params = []
    for fan_in, fan_out in dims:
        key, kw, kb = jax.random.split(key, 3)
        bound = 1.0 / jnp.sqrt(jnp.float32(fan_in))
        w = jax.random.uniform(kw, (fan_in, fan_out), jnp.float32, -bound, bound)
        b = jax.random.uniform(kb, (1, fan_out), jnp.float32, -bound, bound)
        params.extend([w, b])
    return params


LANE = 128  # padded lane width for hidden/output


def pack_dqn_params(params, obs_dim, action_dim,
                    hidden_list=(128, 128, 64), compute_dtype=jnp.bfloat16):
    """Pack + pad the logical params into lane-dense, MXU-friendly form (done once)."""
    (w1, b1, w2, b2, w3, b3, wa1, ba1, wa2, ba2, wv1, bv1, wv2, bv2) = params
    H3 = hidden_list[2]
    assert 2 * H3 <= LANE and action_dim + 1 <= LANE

    def pad_cols(a, n):
        return jnp.pad(a, ((0, 0), (0, n - a.shape[-1])))

    # encoder (third layer padded 64 -> 128 output columns, zero bias on pad)
    W1 = w1.astype(compute_dtype)                       # (obs, 128)
    W2 = w2.astype(compute_dtype)                       # (128, 128)
    W3 = pad_cols(w3, LANE).astype(compute_dtype)       # (128, 128)
    B3 = pad_cols(b3, LANE)                             # (1, 128) f32

    # fused head stage 1: hh = relu(h @ Wh1 + Bh1) = [a_h | v_h]
    Wh1 = jnp.zeros((LANE, 2 * H3), jnp.float32)
    Wh1 = Wh1.at[:H3, :H3].set(wa1)
    Wh1 = Wh1.at[:H3, H3:2 * H3].set(wv1)
    Wh1 = Wh1.astype(compute_dtype)                     # (128, 128)
    Bh1 = jnp.concatenate([ba1, bv1], axis=-1)          # (1, 128) f32

    # fused head stage 2 (block-diagonal): qa = hh @ Wh2 + Bh2
    #   cols [0, A) <- a_h @ wa2 ; col A <- v_h @ wv2 ; rest 0
    Wh2 = jnp.zeros((2 * H3, LANE), jnp.float32)
    Wh2 = Wh2.at[:H3, :action_dim].set(wa2)
    Wh2 = Wh2.at[H3:2 * H3, action_dim:action_dim + 1].set(wv2)
    Wh2 = Wh2.astype(compute_dtype)                     # (128, 128)
    Bh2 = jnp.zeros((1, LANE), jnp.float32)
    Bh2 = Bh2.at[:, :action_dim].set(ba2)
    Bh2 = Bh2.at[:, action_dim:action_dim + 1].set(bv2)

    return [W1, b1, W2, b2, W3, B3, Wh1, Bh1, Wh2, Bh2]


# ---------------------------------------------------------------------------
# Wrapper
# ---------------------------------------------------------------------------
def _round_up(n, m):
    return ((n + m - 1) // m) * m


def dqn_forward(x, packed_params, action_dim, tile_b=512):
    """DQN forward: x (B, obs) f32 -> {'logit': (B, action_dim) f32}."""
    B, obs = x.shape

    # Choose a batch tile: big tiles at replay-batch scale, padded-to-8 at tiny B.
    if B >= tile_b:
        Bp = _round_up(B, tile_b)
        tb = tile_b
    else:
        Bp = _round_up(B, 8)
        tb = Bp
    if Bp != B:
        x = jnp.pad(x, ((0, Bp - B), (0, 0)))
    grid = (pl.cdiv(Bp, tb),)

    # x is tiled over the batch grid; all weights/biases are grid-invariant full blocks.
    x_spec = pl.BlockSpec((tb, obs), lambda i: (i, 0))
    w_specs = [pl.BlockSpec(p.shape, lambda i: (0, 0)) for p in packed_params]
    out_spec = pl.BlockSpec((tb, LANE), lambda i: (i, 0))   # lane-dense padded output

    # Advisory cost estimate for the XLA scheduler.
    flops_per_row = 2 * (obs * 128 + 128 * 128 + 128 * LANE + LANE * 128 + 128 * LANE)
    bytes_accessed = (x.size * x.dtype.itemsize
                      + sum(p.size * p.dtype.itemsize for p in packed_params)
                      + Bp * LANE * 4)
    cost = pl.CostEstimate(flops=Bp * flops_per_row, transcendentals=0,
                           bytes_accessed=bytes_accessed)

    q_padded = pl.pallas_call(
        functools.partial(dqn_kernel, action_dim=action_dim),
        out_shape=jax.ShapeDtypeStruct((Bp, LANE), jnp.float32),
        grid=grid,
        in_specs=[x_spec] + w_specs,
        out_specs=out_spec,
        compiler_params=pltpu.CompilerParams(dimension_semantics=("parallel",)),
        cost_estimate=cost,
    )(x, *packed_params)

    return {'logit': q_padded[:B, :action_dim]}


# ---------------------------------------------------------------------------
# Pure-JAX references for validation
# ---------------------------------------------------------------------------
def dqn_forward_ref(x, params):
    """Full-f32 reference of the original module semantics."""
    (w1, b1, w2, b2, w3, b3, wa1, ba1, wa2, ba2, wv1, bv1, wv2, bv2) = params
    h = jnp.maximum(x @ w1 + b1, 0.0)
    h = jnp.maximum(h @ w2 + b2, 0.0)
    h = jnp.maximum(h @ w3 + b3, 0.0)
    a = jnp.maximum(h @ wa1 + ba1, 0.0) @ wa2 + ba2
    v = jnp.maximum(h @ wv1 + bv1, 0.0) @ wv2 + bv2
    return a - jnp.mean(a, axis=-1, keepdims=True) + v


def dqn_forward_packed_ref(x, packed_params, action_dim):
    """Precision-matched (bf16 MXU inputs, f32 accumulation) reference of the kernel math."""
    W1, b1, W2, b2, W3, B3, Wh1, Bh1, Wh2, Bh2 = packed_params
    cdt = W1.dtype
    f32 = jnp.float32

    def lr(h, w, b):
        return jnp.maximum(jnp.dot(h.astype(cdt), w, preferred_element_type=f32) + b, 0.0)

    h = lr(x, W1, b1)
    h = lr(h, W2, b2)
    h = lr(h, W3, B3)
    hh = lr(h, Wh1, Bh1)
    qa = jnp.dot(hh.astype(cdt), Wh2, preferred_element_type=f32) + Bh2
    a = qa[:, :action_dim]
    v = qa[:, action_dim:action_dim + 1]
    return a - jnp.mean(a, axis=-1, keepdims=True) + v


# ---------------------------------------------------------------------------
if __name__ == "__main__":
    OBS_DIM = 32      # obs_shape
    ACTION_DIM = 6    # action_shape
    BATCH = 4         # matches the module's docstring example

    key = jax.random.PRNGKey(0)
    key_x, key_p = jax.random.split(key)
    x = jax.random.normal(key_x, (BATCH, OBS_DIM), jnp.float32)

    params = make_dqn_params(key_p, OBS_DIM, ACTION_DIM)
    packed = pack_dqn_params(params, OBS_DIM, ACTION_DIM)

    out = dqn_forward(x, packed, ACTION_DIM)
    q = jax.block_until_ready(out['logit'])
    assert q.shape == (BATCH, ACTION_DIM)

    # Tight check vs. a precision-matched JAX reference (same bf16 casts / fusion).
    q_ref_matched = dqn_forward_packed_ref(x, packed, ACTION_DIM)
    assert jnp.allclose(q, q_ref_matched, atol=1e-4, rtol=1e-4), "mismatch vs matched ref"

    # Loose check vs. the full-f32 module semantics (bf16 MXU-input rounding only).
    q_ref_f32 = dqn_forward_ref(x, params)
    assert jnp.allclose(q, q_ref_f32, atol=5e-2, rtol=5e-2), "mismatch vs f32 ref"

    print("KERNEL_OK")
</pallas_src>

<mosaic_0001>
module attributes {stable_mosaic.version = 11 : i64} {
  func.func @dqn_kernel(%arg0: i32, %arg1: memref<8x32xf32, #tpu.memory_space<vmem>>, %arg2: memref<32x128xbf16, #tpu.memory_space<vmem>>, %arg3: memref<1x128xf32, #tpu.memory_space<vmem>>, %arg4: memref<128x128xbf16, #tpu.memory_space<vmem>>, %arg5: memref<1x128xf32, #tpu.memory_space<vmem>>, %arg6: memref<128x128xbf16, #tpu.memory_space<vmem>>, %arg7: memref<1x128xf32, #tpu.memory_space<vmem>>, %arg8: memref<128x128xbf16, #tpu.memory_space<vmem>>, %arg9: memref<1x128xf32, #tpu.memory_space<vmem>>, %arg10: memref<128x128xbf16, #tpu.memory_space<vmem>>, %arg11: memref<1x128xf32, #tpu.memory_space<vmem>>, %arg12: memref<8x128xf32, #tpu.memory_space<vmem>>) attributes {dimension_semantics = [#tpu.dimension_semantics<parallel>], iteration_bounds = array<i64: 1>, scalar_prefetch = 0 : i64, scratch_operands = 0 : i64, tpu.core_type = #tpu.core_type<tc>, window_params = [{transform_indices = @transform_0, window_bounds = array<i64: 8, 32>}, {pipeline_mode = #tpu.pipeline_mode<synchronous>, transform_indices = @transform_1, window_bounds = array<i64: 32, 128>}, {pipeline_mode = #tpu.pipeline_mode<synchronous>, transform_indices = @transform_2, window_bounds = array<i64: 1, 128>}, {pipeline_mode = #tpu.pipeline_mode<synchronous>, transform_indices = @transform_3, window_bounds = array<i64: 128, 128>}, {pipeline_mode = #tpu.pipeline_mode<synchronous>, transform_indices = @transform_4, window_bounds = array<i64: 1, 128>}, {pipeline_mode = #tpu.pipeline_mode<synchronous>, transform_indices = @transform_5, window_bounds = array<i64: 128, 128>}, {pipeline_mode = #tpu.pipeline_mode<synchronous>, transform_indices = @transform_6, window_bounds = array<i64: 1, 128>}, {pipeline_mode = #tpu.pipeline_mode<synchronous>, transform_indices = @transform_7, window_bounds = array<i64: 128, 128>}, {pipeline_mode = #tpu.pipeline_mode<synchronous>, transform_indices = @transform_8, window_bounds = array<i64: 1, 128>}, {pipeline_mode = #tpu.pipeline_mode<synchronous>, transform_indices = @transform_9, window_bounds = array<i64: 128, 128>}, {pipeline_mode = #tpu.pipeline_mode<synchronous>, transform_indices = @transform_10, window_bounds = array<i64: 1, 128>}, {transform_indices = @transform_11, window_bounds = array<i64: 8, 128>}]} {
    %c0 = arith.constant 0 : index
    %c0_0 = arith.constant 0 : index
    %0 = vector.load %arg1[%c0, %c0_0] : memref<8x32xf32, #tpu.memory_space<vmem>>, vector<8x32xf32>
    %1 = arith.truncf %0 : vector<8x32xf32> to vector<8x32xbf16>
    %c0_1 = arith.constant 0 : index
    %c0_2 = arith.constant 0 : index
    %2 = vector.load %arg2[%c0_1, %c0_2] : memref<32x128xbf16, #tpu.memory_space<vmem>>, vector<32x128xbf16>
    %cst = arith.constant dense<0.000000e+00> : vector<8x128xf32>
    %3 = tpu.matmul %1, %2, %cst {dimension_numbers = #tpu.dot_dimension_numbers<[1], [0], [0], [1], [0, 0, 1, 1], [], []>} : vector<8x32xbf16>, vector<32x128xbf16>, vector<8x128xf32> -> vector<8x128xf32>
    %c0_3 = arith.constant 0 : index
    %c0_4 = arith.constant 0 : index
    %4 = vector.load %arg3[%c0_3, %c0_4] : memref<1x128xf32, #tpu.memory_space<vmem>>, vector<1x128xf32>
    %5 = vector.broadcast %4 : vector<1x128xf32> to vector<8x128xf32>
    %6 = arith.addf %3, %5 : vector<8x128xf32>
    %cst_5 = arith.constant 0.000000e+00 : f32
    %7 = vector.broadcast %cst_5 : f32 to vector<8x128xf32>
    %8 = arith.maximumf %6, %7 : vector<8x128xf32>
    %9 = arith.truncf %8 : vector<8x128xf32> to vector<8x128xbf16>
    %c0_6 = arith.constant 0 : index
    %c0_7 = arith.constant 0 : index
    %10 = vector.load %arg4[%c0_6, %c0_7] : memref<128x128xbf16, #tpu.memory_space<vmem>>, vector<128x128xbf16>
    %cst_8 = arith.constant dense<0.000000e+00> : vector<8x128xf32>
    %11 = tpu.matmul %9, %10, %cst_8 {dimension_numbers = #tpu.dot_dimension_numbers<[1], [0], [0], [1], [0, 0, 1, 1], [], []>} : vector<8x128xbf16>, vector<128x128xbf16>, vector<8x128xf32> -> vector<8x128xf32>
    %c0_9 = arith.constant 0 : index
    %c0_10 = arith.constant 0 : index
    %12 = vector.load %arg5[%c0_9, %c0_10] : memref<1x128xf32, #tpu.memory_space<vmem>>, vector<1x128xf32>
    %13 = vector.broadcast %12 : vector<1x128xf32> to vector<8x128xf32>
    %14 = arith.addf %11, %13 : vector<8x128xf32>
    %cst_11 = arith.constant 0.000000e+00 : f32
    %15 = vector.broadcast %cst_11 : f32 to vector<8x128xf32>
    %16 = arith.maximumf %14, %15 : vector<8x128xf32>
    %17 = arith.truncf %16 : vector<8x128xf32> to vector<8x128xbf16>
    %c0_12 = arith.constant 0 : index
    %c0_13 = arith.constant 0 : index
    %18 = vector.load %arg6[%c0_12, %c0_13] : memref<128x128xbf16, #tpu.memory_space<vmem>>, vector<128x128xbf16>
    %cst_14 = arith.constant dense<0.000000e+00> : vector<8x128xf32>
    %19 = tpu.matmul %17, %18, %cst_14 {dimension_numbers = #tpu.dot_dimension_numbers<[1], [0], [0], [1], [0, 0, 1, 1], [], []>} : vector<8x128xbf16>, vector<128x128xbf16>, vector<8x128xf32> -> vector<8x128xf32>
    %c0_15 = arith.constant 0 : index
    %c0_16 = arith.constant 0 : index
    %20 = vector.load %arg7[%c0_15, %c0_16] : memref<1x128xf32, #tpu.memory_space<vmem>>, vector<1x128xf32>
    %21 = vector.broadcast %20 : vector<1x128xf32> to vector<8x128xf32>
    %22 = arith.addf %19, %21 : vector<8x128xf32>
    %cst_17 = arith.constant 0.000000e+00 : f32
    %23 = vector.broadcast %cst_17 : f32 to vector<8x128xf32>
    %24 = arith.maximumf %22, %23 : vector<8x128xf32>
    %25 = arith.truncf %24 : vector<8x128xf32> to vector<8x128xbf16>
    %c0_18 = arith.constant 0 : index
    %c0_19 = arith.constant 0 : index
    %26 = vector.load %arg8[%c0_18, %c0_19] : memref<128x128xbf16, #tpu.memory_space<vmem>>, vector<128x128xbf16>
    %cst_20 = arith.constant dense<0.000000e+00> : vector<8x128xf32>
    %27 = tpu.matmul %25, %26, %cst_20 {dimension_numbers = #tpu.dot_dimension_numbers<[1], [0], [0], [1], [0, 0, 1, 1], [], []>} : vector<8x128xbf16>, vector<128x128xbf16>, vector<8x128xf32> -> vector<8x128xf32>
    %c0_21 = arith.constant 0 : index
    %c0_22 = arith.constant 0 : index
    %28 = vector.load %arg9[%c0_21, %c0_22] : memref<1x128xf32, #tpu.memory_space<vmem>>, vector<1x128xf32>
    %29 = vector.broadcast %28 : vector<1x128xf32> to vector<8x128xf32>
    %30 = arith.addf %27, %29 : vector<8x128xf32>
    %cst_23 = arith.constant 0.000000e+00 : f32
    %31 = vector.broadcast %cst_23 : f32 to vector<8x128xf32>
    %32 = arith.maximumf %30, %31 : vector<8x128xf32>
    %33 = arith.truncf %32 : vector<8x128xf32> to vector<8x128xbf16>
    %c0_24 = arith.constant 0 : index
    %c0_25 = arith.constant 0 : index
    %34 = vector.load %arg10[%c0_24, %c0_25] : memref<128x128xbf16, #tpu.memory_space<vmem>>, vector<128x128xbf16>
    %cst_26 = arith.constant dense<0.000000e+00> : vector<8x128xf32>
    %35 = tpu.matmul %33, %34, %cst_26 {dimension_numbers = #tpu.dot_dimension_numbers<[1], [0], [0], [1], [0, 0, 1, 1], [], []>} : vector<8x128xbf16>, vector<128x128xbf16>, vector<8x128xf32> -> vector<8x128xf32>
    %c0_27 = arith.constant 0 : index
    %c0_28 = arith.constant 0 : index
    %36 = vector.load %arg11[%c0_27, %c0_28] : memref<1x128xf32, #tpu.memory_space<vmem>>, vector<1x128xf32>
    %37 = vector.broadcast %36 : vector<1x128xf32> to vector<8x128xf32>
    %38 = arith.addf %35, %37 : vector<8x128xf32>
    %39 = tpu.iota {dimensions = array<i32: 1>} : vector<8x128xi32>
    %c6_i32 = arith.constant 6 : i32
    %40 = vector.broadcast %c6_i32 : i32 to vector<8x128xi32>
    %41 = arith.cmpi slt, %39, %40 : vector<8x128xi32>
    %cst_29 = arith.constant 0.000000e+00 : f32
    %42 = vector.broadcast %cst_29 : f32 to vector<8x128xf32>
    %43 = arith.select %41, %38, %42 : vector<8x128xi1>, vector<8x128xf32>
    %cst_30 = arith.constant dense<0.000000e+00> : vector<8xf32>
    %44 = vector.multi_reduction <add>, %43, %cst_30 [1] : vector<8x128xf32> to vector<8xf32>
    %45 = vector.shape_cast %44 : vector<8xf32> to vector<8x1xf32>
    %cst_31 = arith.constant 0.166666672 : f32
    %46 = vector.broadcast %cst_31 : f32 to vector<8x1xf32>
    %47 = arith.mulf %45, %46 : vector<8x1xf32>
    %c6_i32_32 = arith.constant 6 : i32
    %48 = vector.broadcast %c6_i32_32 : i32 to vector<8x128xi32>
    %49 = arith.cmpi eq, %39, %48 : vector<8x128xi32>
    %cst_33 = arith.constant 0.000000e+00 : f32
    %50 = vector.broadcast %cst_33 : f32 to vector<8x128xf32>
    %51 = arith.select %49, %38, %50 : vector<8x128xi1>, vector<8x128xf32>
    %cst_34 = arith.constant dense<0.000000e+00> : vector<8xf32>
    %52 = vector.multi_reduction <add>, %51, %cst_34 [1] : vector<8x128xf32> to vector<8xf32>
    %53 = vector.shape_cast %52 : vector<8xf32> to vector<8x1xf32>
    %54 = vector.broadcast %47 : vector<8x1xf32> to vector<8x128xf32>
    %55 = arith.subf %38, %54 : vector<8x128xf32>
    %56 = vector.broadcast %53 : vector<8x1xf32> to vector<8x128xf32>
    %57 = arith.addf %55, %56 : vector<8x128xf32>
    %cst_35 = arith.constant 0.000000e+00 : f32
    %58 = vector.broadcast %cst_35 : f32 to vector<8x128xf32>
    %59 = arith.select %41, %57, %58 : vector<8x128xi1>, vector<8x128xf32>
    %c0_36 = arith.constant 0 : index
    %c0_37 = arith.constant 0 : index
    %60 = vector.load %arg12[%c0_36, %c0_37] : memref<8x128xf32, #tpu.memory_space<vmem>>, vector<8x128xf32>
    tpu.vector_store %arg12[%c0_36, %c0_37], %59 {strides = array<i32>} : memref<8x128xf32, #tpu.memory_space<vmem>>, vector<8x128xf32>,
    return
  }
  func.func @transform_0(%arg0: i32) -> (i32, i32) {
    %c0_i32 = arith.constant 0 : i32
    %c0_i32_0 = arith.constant 0 : i32
    return %arg0, %c0_i32 : i32, i32
  }
  func.func @transform_1(%arg0: i32) -> (i32, i32) {
    %c0_i32 = arith.constant 0 : i32
    %c0_i32_0 = arith.constant 0 : i32
    %c0_i32_1 = arith.constant 0 : i32
    return %c0_i32, %c0_i32_0 : i32, i32
  }
  func.func @transform_2(%arg0: i32) -> (i32, i32) {
    %c0_i32 = arith.constant 0 : i32
    %c0_i32_0 = arith.constant 0 : i32
    %c0_i32_1 = arith.constant 0 : i32
    return %c0_i32, %c0_i32_0 : i32, i32
  }
  func.func @transform_3(%arg0: i32) -> (i32, i32) {
    %c0_i32 = arith.constant 0 : i32
    %c0_i32_0 = arith.constant 0 : i32
    %c0_i32_1 = arith.constant 0 : i32
    return %c0_i32, %c0_i32_0 : i32, i32
  }
  func.func @transform_4(%arg0: i32) -> (i32, i32) {
    %c0_i32 = arith.constant 0 : i32
    %c0_i32_0 = arith.constant 0 : i32
    %c0_i32_1 = arith.constant 0 : i32
    return %c0_i32, %c0_i32_0 : i32, i32
  }
  func.func @transform_5(%arg0: i32) -> (i32, i32) {
    %c0_i32 = arith.constant 0 : i32
    %c0_i32_0 = arith.constant 0 : i32
    %c0_i32_1 = arith.constant 0 : i32
    return %c0_i32, %c0_i32_0 : i32, i32
  }
  func.func @transform_6(%arg0: i32) -> (i32, i32) {
    %c0_i32 = arith.constant 0 : i32
    %c0_i32_0 = arith.constant 0 : i32
    %c0_i32_1 = arith.constant 0 : i32
    return %c0_i32, %c0_i32_0 : i32, i32
  }
  func.func @transform_7(%arg0: i32) -> (i32, i32) {
    %c0_i32 = arith.constant 0 : i32
    %c0_i32_0 = arith.constant 0 : i32
    %c0_i32_1 = arith.constant 0 : i32
    return %c0_i32, %c0_i32_0 : i32, i32
  }
  func.func @transform_8(%arg0: i32) -> (i32, i32) {
    %c0_i32 = arith.constant 0 : i32
    %c0_i32_0 = arith.constant 0 : i32
    %c0_i32_1 = arith.constant 0 : i32
    return %c0_i32, %c0_i32_0 : i32, i32
  }
  func.func @transform_9(%arg0: i32) -> (i32, i32) {
    %c0_i32 = arith.constant 0 : i32
    %c0_i32_0 = arith.constant 0 : i32
    %c0_i32_1 = arith.constant 0 : i32
    return %c0_i32, %c0_i32_0 : i32, i32
  }
  func.func @transform_10(%arg0: i32) -> (i32, i32) {
    %c0_i32 = arith.constant 0 : i32
    %c0_i32_0 = arith.constant 0 : i32
    %c0_i32_1 = arith.constant 0 : i32
    return %c0_i32, %c0_i32_0 : i32, i32
  }
  func.func @transform_11(%arg0: i32) -> (i32, i32) {
    %c0_i32 = arith.constant 0 : i32
    %c0_i32_0 = arith.constant 0 : i32
    return %arg0, %c0_i32 : i32, i32
  }
}

</mosaic_0001>

<llo_original>
// kernel: tpu_custom_call.1
$region0: #{tpu_custom_call.1}
  #allocation0 [shape = 'u32[]', space=smem, size = 0x4, offset = 0x4, fixed_abs, tag = 'smem constant byte address 0x4 - core index']
  #allocation1 [shape = 'u32[144,128]{1,0:T(1,128)}', space=vmem, size = 0x12000, scoped, tag = 'internal scratch']
  %s0 = inlined_call_operand.hbm [shape: f32[8,32], index: 0, kind: input, shape index: {}]
  %s1 = inlined_call_operand.hbm [shape: bf16[32,128], index: 1, kind: input, shape index: {}]
  %s2 = inlined_call_operand.vmem [shape: f32[1,128], index: 2, kind: input, shape index: {}]
  %s3 = inlined_call_operand.hbm [shape: bf16[128,128], index: 3, kind: input, shape index: {}]
  %s4 = inlined_call_operand.vmem [shape: f32[1,128], index: 4, kind: input, shape index: {}]
  %s5 = inlined_call_operand.hbm [shape: bf16[128,128], index: 5, kind: input, shape index: {}]
  %s6 = inlined_call_operand.vmem [shape: f32[1,128], index: 6, kind: input, shape index: {}]
  %s7 = inlined_call_operand.hbm [shape: bf16[128,128], index: 7, kind: input, shape index: {}]
  %s8 = inlined_call_operand.vmem [shape: f32[1,128], index: 8, kind: input, shape index: {}]
  %s9 = inlined_call_operand.hbm [shape: bf16[128,128], index: 9, kind: input, shape index: {}]
  %s10 = inlined_call_operand.vmem [shape: f32[1,128], index: 10, kind: input, shape index: {}]
  %s11 = inlined_call_operand.hbm [shape: f32[8,128], index: 11, kind: output, shape index: {}]
  %s12 = sld [smem:[#allocation0]]
  $region78: #{tpu_custom_call.1} parent=0
    _
  %s14 = ssub.s32 1, %s12
  %s15 = scalar_select 0, %s14, %s12
  $region1: #{tpu_custom_call.1} parent=0
    #allocation2 [shape = 'u8[4096]{0}', space=vmem, size = 0x1000, scoped, tag = 'input window, operand 0, single buffered']
    #allocation3 [shape = 's32[1]{0}', space=sflag, size = 0x4, scoped, tag = 'scoped memory for tpu_custom_call.1']
    #allocation4 [shape = 's32[1]{0}', space=sflag, size = 0x4, scoped, tag = 'scoped memory for tpu_custom_call.1']
    #allocation5 [shape = 'u8[8192]{0}', space=vmem, size = 0x2000, scoped, tag = 'input window, operand 1, single buffered']
    #allocation6 [shape = 's32[1]{0}', space=sflag, size = 0x4, scoped, tag = 'scoped memory for tpu_custom_call.1']
    #allocation7 [shape = 'u8[32768]{0}', space=vmem, size = 0x8000, scoped, tag = 'input window, operand 3, single buffered']
    #allocation8 [shape = 'u8[32768]{0}', space=vmem, size = 0x8000, scoped, tag = 'input window, operand 5, single buffered']
    #allocation9 [shape = 's32[1]{0}', space=sflag, size = 0x4, scoped, tag = 'scoped memory for tpu_custom_call.1']
    #allocation10 [shape = 'u8[32768]{0}', space=vmem, size = 0x8000, scoped, tag = 'input window, operand 7, single buffered']
    #allocation11 [shape = 'u8[32768]{0}', space=vmem, size = 0x8000, scoped, tag = 'input window, operand 9, single buffered']
    #allocation12 [shape = 's32[1]{0}', space=sflag, size = 0x4, scoped, tag = 'scoped memory for tpu_custom_call.1']
    #allocation13 [shape = 'u8[4096]{0}', space=vmem, size = 0x1000, scoped, tag = 'output window, operand 0, single buffered']
    %16 = vsyncpa [#allocation3], 0
    %17 = vsyncpa [#allocation6], 0
    %18 = vsyncpa [#allocation9], 0
    %19 = vsyncpa [#allocation12], 0
    %20 = vsyncpa [#allocation4], 0
    // Predicated region
    $region2: #{tpu_custom_call.1} parent=1 // pred_check
      _
    $region3: #{tpu_custom_call.1} parent=1 // pred_check_branch
      %22 = sbr.rel (0) target = $region5
    $region4: #{tpu_custom_call.1} parent=1 // pred_region
      %s24 = ssub.s32 128, 128
      %25 = vsyncadd [#allocation3], %s24
      %s27 = sshll.u32 [#allocation2], 4
      %s28 = int_to_ptr.vmem [resolvable:$true] %s27
      %30 = dma.hbm_to_vmem [thread:$0]  %s0, 128, %s28, [#allocation3]
    $region5: #{tpu_custom_call.1} parent=1 // pred_fallthru
      _
    // Predicated region
    $region6: #{tpu_custom_call.1} parent=1 // pred_check
      _
    $region7: #{tpu_custom_call.1} parent=1 // pred_check_branch
      %32 = sbr.rel (0) target = $region9
    $region8: #{tpu_custom_call.1} parent=1 // pred_region
      %s34 = ssub.s32 256, 256
      %35 = vsyncadd [#allocation6], %s34
      %s36 = sshll.u32 [#allocation5], 4
      %s37 = int_to_ptr.vmem [resolvable:$true] %s36
      %42 = dma.hbm_to_vmem [thread:$0]  %s1, 256, %s37, [#allocation6], 64, 64, 4
    $region9: #{tpu_custom_call.1} parent=1 // pred_fallthru
      _
    // Predicated region
    $region10: #{tpu_custom_call.1} parent=1 // pred_check
      _
    $region11: #{tpu_custom_call.1} parent=1 // pred_check_branch
      %44 = sbr.rel (0) target = $region13
    $region12: #{tpu_custom_call.1} parent=1 // pred_region
      _
    $region13: #{tpu_custom_call.1} parent=1 // pred_fallthru
      _
    // Predicated region
    $region14: #{tpu_custom_call.1} parent=1 // pred_check
      _
    $region15: #{tpu_custom_call.1} parent=1 // pred_check_branch
      %46 = sbr.rel (0) target = $region17
    $region16: #{tpu_custom_call.1} parent=1 // pred_region
      %s48 = ssub.s32 1024, 1024
      %49 = vsyncadd [#allocation6], %s48
      %s50 = sshll.u32 [#allocation7], 4
      %s51 = int_to_ptr.vmem [resolvable:$true] %s50
      %56 = dma.hbm_to_vmem [thread:$0]  %s3, 1024, %s51, [#allocation6], 64, 64, 4
    $region17: #{tpu_custom_call.1} parent=1 // pred_fallthru
      _
    // Predicated region
    $region18: #{tpu_custom_call.1} parent=1 // pred_check
      _
    $region19: #{tpu_custom_call.1} parent=1 // pred_check_branch
      %58 = sbr.rel (0) target = $region21
    $region20: #{tpu_custom_call.1} parent=1 // pred_region
      _
    $region21: #{tpu_custom_call.1} parent=1 // pred_fallthru
      _
    // Predicated region
    $region22: #{tpu_custom_call.1} parent=1 // pred_check
      _
    $region23: #{tpu_custom_call.1} parent=1 // pred_check_branch
      %60 = sbr.rel (0) target = $region25
    $region24: #{tpu_custom_call.1} parent=1 // pred_region
      %s62 = ssub.s32 1024, 1024
      %63 = vsyncadd [#allocation9], %s62
      %s64 = sshll.u32 [#allocation8], 4
      %s65 = int_to_ptr.vmem [resolvable:$true] %s64
      %70 = dma.hbm_to_vmem [thread:$0]  %s5, 1024, %s65, [#allocation9], 64, 64, 4
    $region25: #{tpu_custom_call.1} parent=1 // pred_fallthru
      _
    // Predicated region
    $region26: #{tpu_custom_call.1} parent=1 // pred_check
      _
    $region27: #{tpu_custom_call.1} parent=1 // pred_check_branch
      %72 = sbr.rel (0) target = $region29
    $region28: #{tpu_custom_call.1} parent=1 // pred_region
      _
    $region29: #{tpu_custom_call.1} parent=1 // pred_fallthru
      _
    // Predicated region
    $region30: #{tpu_custom_call.1} parent=1 // pred_check
      _
    $region31: #{tpu_custom_call.1} parent=1 // pred_check_branch
      %74 = sbr.rel (0) target = $region33
    $region32: #{tpu_custom_call.1} parent=1 // pred_region
      %s76 = ssub.s32 1024, 1024
      %77 = vsyncadd [#allocation9], %s76
      %s78 = sshll.u32 [#allocation10], 4
      %s79 = int_to_ptr.vmem [resolvable:$true] %s78
      %84 = dma.hbm_to_vmem [thread:$0]  %s7, 1024, %s79, [#allocation9], 64, 64, 4
    $region33: #{tpu_custom_call.1} parent=1 // pred_fallthru
      _
    // Predicated region
    $region34: #{tpu_custom_call.1} parent=1 // pred_check
      _
    $region35: #{tpu_custom_call.1} parent=1 // pred_check_branch
      %86 = sbr.rel (0) target = $region37
    $region36: #{tpu_custom_call.1} parent=1 // pred_region
      _
    $region37: #{tpu_custom_call.1} parent=1 // pred_fallthru
      _
    // Predicated region
    $region38: #{tpu_custom_call.1} parent=1 // pred_check
      _
    $region39: #{tpu_custom_call.1} parent=1 // pred_check_branch
      %88 = sbr.rel (0) target = $region41
    $region40: #{tpu_custom_call.1} parent=1 // pred_region
      %s90 = ssub.s32 1024, 1024
      %91 = vsyncadd [#allocation12], %s90
      %s92 = sshll.u32 [#allocation11], 4
      %s93 = int_to_ptr.vmem [resolvable:$true] %s92
      %98 = dma.hbm_to_vmem [thread:$0]  %s9, 1024, %s93, [#allocation12], 64, 64, 4
    $region41: #{tpu_custom_call.1} parent=1 // pred_fallthru
      _
    // Predicated region
    $region42: #{tpu_custom_call.1} parent=1 // pred_check
      _
    $region43: #{tpu_custom_call.1} parent=1 // pred_check_branch
      %100 = sbr.rel (0) target = $region45
    $region44: #{tpu_custom_call.1} parent=1 // pred_region
      _
    $region45: #{tpu_custom_call.1} parent=1 // pred_fallthru
      _
    // Predicated region
    $region46: #{tpu_custom_call.1} parent=1 // pred_check
      _
    $region47: #{tpu_custom_call.1} parent=1 // pred_check_branch
      %102 = sbr.rel (0) target = $region49
    $region48: #{tpu_custom_call.1} parent=1 // pred_region
      %103 = dma.done [#allocation3], 128
    $region49: #{tpu_custom_call.1} parent=1 // pred_fallthru
      _
    // Predicated region
    $region50: #{tpu_custom_call.1} parent=1 // pred_check
      _
    $region51: #{tpu_custom_call.1} parent=1 // pred_check_branch
      %105 = sbr.rel (0) target = $region53
    $region52: #{tpu_custom_call.1} parent=1 // pred_region
      %106 = dma.done [#allocation6], 256
    $region53: #{tpu_custom_call.1} parent=1 // pred_fallthru
      _
    // Predicated region
    $region54: #{tpu_custom_call.1} parent=1 // pred_check
      _
    $region55: #{tpu_custom_call.1} parent=1 // pred_check_branch
      %108 = sbr.rel (0) target = $region57
    $region56: #{tpu_custom_call.1} parent=1 // pred_region
      %109 = dma.done [#allocation6], 1024
    $region57: #{tpu_custom_call.1} parent=1 // pred_fallthru
      _
    // Predicated region
    $region58: #{tpu_custom_call.1} parent=1 // pred_check
      _
    $region59: #{tpu_custom_call.1} parent=1 // pred_check_branch
      %111 = sbr.rel (0) target = $region61
    $region60: #{tpu_custom_call.1} parent=1 // pred_region
      %112 = dma.done [#allocation9], 1024
    $region61: #{tpu_custom_call.1} parent=1 // pred_fallthru
      _
    // Predicated region
    $region62: #{tpu_custom_call.1} parent=1 // pred_check
      _
    $region63: #{tpu_custom_call.1} parent=1 // pred_check_branch
      %114 = sbr.rel (0) target = $region65
    $region64: #{tpu_custom_call.1} parent=1 // pred_region
      %115 = dma.done [#allocation9], 1024
    $region65: #{tpu_custom_call.1} parent=1 // pred_fallthru
      _
    // Predicated region
    $region66: #{tpu_custom_call.1} parent=1 // pred_check
      _
    $region67: #{tpu_custom_call.1} parent=1 // pred_check_branch
      %117 = sbr.rel (0) target = $region69
    $region68: #{tpu_custom_call.1} parent=1 // pred_region
      %118 = dma.done [#allocation12], 1024
    $region69: #{tpu_custom_call.1} parent=1 // pred_fallthru
      _
    %v120 = vld [vmem:[#allocation2] sm:$0xff]
    %v121 = vpack.c.bf16 %v120, %v120
    %v122 = vld [vmem:[#allocation5] sm:$0xf]
    %v123 = vld [vmem:[#allocation5 + $0x4] sm:$0xf]
    %v124 = vld [vmem:[#allocation5 + $0x8] sm:$0xf]
    %v125 = vld [vmem:[#allocation5 + $0xc] sm:$0xf]
    %v126 = vld [vmem:[%s2] sm:$0x1]
    %v128 = vlaneseq
    %v129 = vshrl.u32 %v128, 7
    %v130 = vsub.s32 0, %v129
    %v131 = vrot.slane %v126, %v130
    %v137 = vunpack.c.l.b16 %v122
    %v138 = vunpack.c.l.b16 %v123
    %v139 = vunpack.c.l.b16 %v124
    %v140 = vunpack.c.l.b16 %v125
    %v141 = vpack.c.b16 %v138, %v137
    %v142 = vpack.c.b16 %v140, %v139
    %vm145 = vcmask 261120
    %v147 = vsel %vm145, %v121, 0
    %149 = vmatprep.subr.bf16.mxu0 0
    %150 = vmatpush1.bf16.msra.mxu0 %v141
    %151 = vmatprep.subr.bf16.mxu0 0
    %152 = vmatpush1.bf16.msra.mxu0 %v142
    %153 = vmatprep.subr.bf16.mxu0 0
    %154 = vmatpush1.bf16.msra.mxu0 0
    %155 = vmatprep.subr.bf16.mxu0 0
    %156 = vmatpush1.bf16.msra.mxu0 0
    %157 = vmatprep.subr.bf16.mxu0 0
    %158 = vmatpush1.bf16.msra.mxu0 0
    %159 = vmatprep.subr.bf16.mxu0 0
    %160 = vmatpush1.bf16.msra.mxu0 0
    %161 = vmatprep.subr.bf16.mxu0 0
    %162 = vmatpush1.bf16.msra.mxu0 0
    %163 = vmatprep.subr.bf16.mxu0 0
    %164 = vmatpush1.bf16.msra.mxu0 0
    %165 = vmatprep.subr.bf16.mxu0 0
    %166 = vmatpush1.bf16.msra.mxu0 0
    %167 = vmatprep.subr.bf16.mxu0 0
    %168 = vmatpush1.bf16.msra.mxu0 0
    %169 = vmatprep.subr.bf16.mxu0 0
    %170 = vmatpush1.bf16.msra.mxu0 0
    %171 = vmatprep.subr.bf16.mxu0 0
    %172 = vmatpush1.bf16.msra.mxu0 0
    %173 = vmatprep.subr.bf16.mxu0 0
    %174 = vmatpush1.bf16.msra.mxu0 0
    %175 = vmatprep.subr.bf16.mxu0 0
    %176 = vmatpush1.bf16.msra.mxu0 0
    %177 = vmatprep.subr.bf16.mxu0 0
    %178 = vmatpush1.bf16.msra.mxu0 0
    %179 = vmatprep.subr.bf16.mxu0 0
    %180 = vmatpush1.bf16.msra.mxu0 0
    %181 = vmatprep.mubr.bf16.mxu0 0
    %182 = vmatmul.mubr.bf16.gmra.mrb[0].mxu0 %v147
    %v183 = vpop.f32.mrb[0].mxu0
    %v184 = vadd.f32 %v131, %v183
    %v185 = vpop.f32.mrb[0].mxu0
    %v186 = vpop.f32.mrb[0].mxu0
    %v187 = vpop.f32.mrb[0].mxu0
    %188 = vdwg.mxu0
    %v189 = vmax.f32 %v184, 0.0
    %v190 = vpack.c.bf16 %v189, %v189
    %v191 = vld [vmem:[#allocation7] sm:$0xf]
    %v192 = vld [vmem:[#allocation7 + $0x4] sm:$0xf]
    %v193 = vld [vmem:[#allocation7 + $0x8] sm:$0xf]
    %v194 = vld [vmem:[#allocation7 + $0xc] sm:$0xf]
    %v195 = vld [vmem:[#allocation7 + $0x10] sm:$0xf]
    %v196 = vld [vmem:[#allocation7 + $0x14] sm:$0xf]
    %v197 = vld [vmem:[#allocation7 + $0x18] sm:$0xf]
    %v198 = vld [vmem:[#allocation7 + $0x1c] sm:$0xf]
    %v199 = vld [vmem:[#allocation7 + $0x20] sm:$0xf]
    %v200 = vld [vmem:[#allocation7 + $0x24] sm:$0xf]
    %v201 = vld [vmem:[#allocation7 + $0x28] sm:$0xf]
    %v202 = vld [vmem:[#allocation7 + $0x2c] sm:$0xf]
    %v203 = vld [vmem:[#allocation7 + $0x30] sm:$0xf]
    %v204 = vld [vmem:[#allocation7 + $0x34] sm:$0xf]
    %v205 = vld [vmem:[#allocation7 + $0x38] sm:$0xf]
    %v206 = vld [vmem:[#allocation7 + $0x3c] sm:$0xf]
    %v207 = vld [vmem:[%s4] sm:$0x1]
    %v209 = vlaneseq
    %v210 = vshrl.u32 %v209, 7
    %v211 = vsub.s32 0, %v210
    %v212 = vrot.slane %v207, %v211
    %v230 = vunpack.c.l.b16 %v191
    %v231 = vunpack.c.l.b16 %v192
    %v232 = vunpack.c.l.b16 %v193
    %v233 = vunpack.c.l.b16 %v194
    %v234 = vunpack.c.l.b16 %v195
    %v235 = vunpack.c.l.b16 %v196
    %v236 = vunpack.c.l.b16 %v197
    %v237 = vunpack.c.l.b16 %v198
    %v238 = vunpack.c.l.b16 %v199
    %v239 = vunpack.c.l.b16 %v200
    %v240 = vunpack.c.l.b16 %v201
    %v241 = vunpack.c.l.b16 %v202
    %v242 = vunpack.c.l.b16 %v203
    %v243 = vunpack.c.l.b16 %v204
    %v244 = vunpack.c.l.b16 %v205
    %v245 = vunpack.c.l.b16 %v206
    %v246 = vpack.c.b16 %v231, %v230
    %v247 = vpack.c.b16 %v233, %v232
    %v248 = vpack.c.b16 %v235, %v234
    %v249 = vpack.c.b16 %v237, %v236
    %v250 = vpack.c.b16 %v239, %v238
    %v251 = vpack.c.b16 %v241, %v240
    %v252 = vpack.c.b16 %v243, %v242
    %v253 = vpack.c.b16 %v245, %v244
    %262 = vmatprep.subr.bf16.mxu0 0
    %263 = vmatpush1.bf16.msra.mxu0 %v246
    %264 = vmatprep.subr.bf16.mxu0 0
    %265 = vmatpush1.bf16.msra.mxu0 %v247
    %266 = vmatprep.subr.bf16.mxu0 0
    %267 = vmatpush1.bf16.msra.mxu0 %v248
    %268 = vmatprep.subr.bf16.mxu0 0
    %269 = vmatpush1.bf16.msra.mxu0 %v249
    %270 = vmatprep.subr.bf16.mxu0 0
    %271 = vmatpush1.bf16.msra.mxu0 %v250
    %272 = vmatprep.subr.bf16.mxu0 0
    %273 = vmatpush1.bf16.msra.mxu0 %v251
    %274 = vmatprep.subr.bf16.mxu0 0
    %275 = vmatpush1.bf16.msra.mxu0 %v252
    %276 = vmatprep.subr.bf16.mxu0 0
    %277 = vmatpush1.bf16.msra.mxu0 %v253
    %278 = vmatprep.subr.bf16.mxu0 0
    %279 = vmatpush1.bf16.msra.mxu0 0
    %280 = vmatprep.subr.bf16.mxu0 0
    %281 = vmatpush1.bf16.msra.mxu0 0
    %282 = vmatprep.subr.bf16.mxu0 0
    %283 = vmatpush1.bf16.msra.mxu0 0
    %284 = vmatprep.subr.bf16.mxu0 0
    %285 = vmatpush1.bf16.msra.mxu0 0
    %286 = vmatprep.subr.bf16.mxu0 0
    %287 = vmatpush1.bf16.msra.mxu0 0
    %288 = vmatprep.subr.bf16.mxu0 0
    %289 = vmatpush1.bf16.msra.mxu0 0
    %290 = vmatprep.subr.bf16.mxu0 0
    %291 = vmatpush1.bf16.msra.mxu0 0
    %292 = vmatprep.subr.bf16.mxu0 0
    %293 = vmatpush1.bf16.msra.mxu0 0
    %294 = vmatprep.mubr.bf16.mxu0 0
    %295 = vmatmul.mubr.bf16.gmra.mrb[0].mxu0 %v190
    %v296 = vpop.f32.mrb[0].mxu0
    %v297 = vadd.f32 %v212, %v296
    %v298 = vpop.f32.mrb[0].mxu0
    %v299 = vpop.f32.mrb[0].mxu0
    %v300 = vpop.f32.mrb[0].mxu0
    %301 = vdwg.mxu0
    %v302 = vmax.f32 %v297, 0.0
    %v303 = vpack.c.bf16 %v302, %v302
    %v304 = vld [vmem:[#allocation8] sm:$0xf]
    %v305 = vld [vmem:[#allocation8 + $0x4] sm:$0xf]
    %v306 = vld [vmem:[#allocation8 + $0x8] sm:$0xf]
    %v307 = vld [vmem:[#allocation8 + $0xc] sm:$0xf]
    %v308 = vld [vmem:[#allocation8 + $0x10] sm:$0xf]
    %v309 = vld [vmem:[#allocation8 + $0x14] sm:$0xf]
    %v310 = vld [vmem:[#allocation8 + $0x18] sm:$0xf]
    %v311 = vld [vmem:[#allocation8 + $0x1c] sm:$0xf]
    %v312 = vld [vmem:[#allocation8 + $0x20] sm:$0xf]
    %v313 = vld [vmem:[#allocation8 + $0x24] sm:$0xf]
    %v314 = vld [vmem:[#allocation8 + $0x28] sm:$0xf]
    %v315 = vld [vmem:[#allocation8 + $0x2c] sm:$0xf]
    %v316 = vld [vmem:[#allocation8 + $0x30] sm:$0xf]
    %v317 = vld [vmem:[#allocation8 + $0x34] sm:$0xf]
    %v318 = vld [vmem:[#allocation8 + $0x38] sm:$0xf]
    %v319 = vld [vmem:[#allocation8 + $0x3c] sm:$0xf]
    %v320 = vld [vmem:[%s6] sm:$0x1]
    %v322 = vlaneseq
    %v323 = vshrl.u32 %v322, 7
    %v324 = vsub.s32 0, %v323
    %v325 = vrot.slane %v320, %v324
    %v343 = vunpack.c.l.b16 %v304
    %v344 = vunpack.c.l.b16 %v305
    %v345 = vunpack.c.l.b16 %v306
    %v346 = vunpack.c.l.b16 %v307
    %v347 = vunpack.c.l.b16 %v308
    %v348 = vunpack.c.l.b16 %v309
    %v349 = vunpack.c.l.b16 %v310
    %v350 = vunpack.c.l.b16 %v311
    %v351 = vunpack.c.l.b16 %v312
    %v352 = vunpack.c.l.b16 %v313
    %v353 = vunpack.c.l.b16 %v314
    %v354 = vunpack.c.l.b16 %v315
    %v355 = vunpack.c.l.b16 %v316
    %v356 = vunpack.c.l.b16 %v317
    %v357 = vunpack.c.l.b16 %v318
    %v358 = vunpack.c.l.b16 %v319
    %v359 = vpack.c.b16 %v344, %v343
    %v360 = vpack.c.b16 %v346, %v345
    %v361 = vpack.c.b16 %v348, %v347
    %v362 = vpack.c.b16 %v350, %v349
    %v363 = vpack.c.b16 %v352, %v351
    %v364 = vpack.c.b16 %v354, %v353
    %v365 = vpack.c.b16 %v356, %v355
    %v366 = vpack.c.b16 %v358, %v357
    %375 = vmatprep.subr.bf16.mxu0 0
    %376 = vmatpush1.bf16.msra.mxu0 %v359
    %377 = vmatprep.subr.bf16.mxu0 0
    %378 = vmatpush1.bf16.msra.mxu0 %v360
    %379 = vmatprep.subr.bf16.mxu0 0
    %380 = vmatpush1.bf16.msra.mxu0 %v361
    %381 = vmatprep.subr.bf16.mxu0 0
    %382 = vmatpush1.bf16.msra.mxu0 %v362
    %383 = vmatprep.subr.bf16.mxu0 0
    %384 = vmatpush1.bf16.msra.mxu0 %v363
    %385 = vmatprep.subr.bf16.mxu0 0
    %386 = vmatpush1.bf16.msra.mxu0 %v364
    %387 = vmatprep.subr.bf16.mxu0 0
    %388 = vmatpush1.bf16.msra.mxu0 %v365
    %389 = vmatprep.subr.bf16.mxu0 0
    %390 = vmatpush1.bf16.msra.mxu0 %v366
    %391 = vmatprep.subr.bf16.mxu0 0
    %392 = vmatpush1.bf16.msra.mxu0 0
    %393 = vmatprep.subr.bf16.mxu0 0
    %394 = vmatpush1.bf16.msra.mxu0 0
    %395 = vmatprep.subr.bf16.mxu0 0
    %396 = vmatpush1.bf16.msra.mxu0 0
    %397 = vmatprep.subr.bf16.mxu0 0
    %398 = vmatpush1.bf16.msra.mxu0 0
    %399 = vmatprep.subr.bf16.mxu0 0
    %400 = vmatpush1.bf16.msra.mxu0 0
    %401 = vmatprep.subr.bf16.mxu0 0
    %402 = vmatpush1.bf16.msra.mxu0 0
    %403 = vmatprep.subr.bf16.mxu0 0
    %404 = vmatpush1.bf16.msra.mxu0 0
    %405 = vmatprep.subr.bf16.mxu0 0
    %406 = vmatpush1.bf16.msra.mxu0 0
    %407 = vmatprep.mubr.bf16.mxu0 0
    %408 = vmatmul.mubr.bf16.gmra.mrb[0].mxu0 %v303
    %v409 = vpop.f32.mrb[0].mxu0
    %v410 = vadd.f32 %v325, %v409
    %v411 = vpop.f32.mrb[0].mxu0
    %v412 = vpop.f32.mrb[0].mxu0
    %v413 = vpop.f32.mrb[0].mxu0
    %414 = vdwg.mxu0
    %v415 = vmax.f32 %v410, 0.0
    %v416 = vpack.c.bf16 %v415, %v415
    %v417 = vld [vmem:[#allocation10] sm:$0xf]
    %v418 = vld [vmem:[#allocation10 + $0x4] sm:$0xf]
    %v419 = vld [vmem:[#allocation10 + $0x8] sm:$0xf]
    %v420 = vld [vmem:[#allocation10 + $0xc] sm:$0xf]
    %v421 = vld [vmem:[#allocation10 + $0x10] sm:$0xf]
    %v422 = vld [vmem:[#allocation10 + $0x14] sm:$0xf]
    %v423 = vld [vmem:[#allocation10 + $0x18] sm:$0xf]
    %v424 = vld [vmem:[#allocation10 + $0x1c] sm:$0xf]
    %v425 = vld [vmem:[#allocation10 + $0x20] sm:$0xf]
    %v426 = vld [vmem:[#allocation10 + $0x24] sm:$0xf]
    %v427 = vld [vmem:[#allocation10 + $0x28] sm:$0xf]
    %v428 = vld [vmem:[#allocation10 + $0x2c] sm:$0xf]
    %v429 = vld [vmem:[#allocation10 + $0x30] sm:$0xf]
    %v430 = vld [vmem:[#allocation10 + $0x34] sm:$0xf]
    %v431 = vld [vmem:[#allocation10 + $0x38] sm:$0xf]
    %v432 = vld [vmem:[#allocation10 + $0x3c] sm:$0xf]
    %v433 = vld [vmem:[%s8] sm:$0x1]
    %v435 = vlaneseq
    %v436 = vshrl.u32 %v435, 7
    %v437 = vsub.s32 0, %v436
    %v438 = vrot.slane %v433, %v437
    %v456 = vunpack.c.l.b16 %v417
    %v457 = vunpack.c.l.b16 %v418
    %v458 = vunpack.c.l.b16 %v419
    %v459 = vunpack.c.l.b16 %v420
    %v460 = vunpack.c.l.b16 %v421
    %v461 = vunpack.c.l.b16 %v422
    %v462 = vunpack.c.l.b16 %v423
    %v463 = vunpack.c.l.b16 %v424
    %v464 = vunpack.c.l.b16 %v425
    %v465 = vunpack.c.l.b16 %v426
    %v466 = vunpack.c.l.b16 %v427
    %v467 = vunpack.c.l.b16 %v428
    %v468 = vunpack.c.l.b16 %v429
    %v469 = vunpack.c.l.b16 %v430
    %v470 = vunpack.c.l.b16 %v431
    %v471 = vunpack.c.l.b16 %v432
    %v472 = vpack.c.b16 %v457, %v456
    %v473 = vpack.c.b16 %v459, %v458
    %v474 = vpack.c.b16 %v461, %v460
    %v475 = vpack.c.b16 %v463, %v462
    %v476 = vpack.c.b16 %v465, %v464
    %v477 = vpack.c.b16 %v467, %v466
    %v478 = vpack.c.b16 %v469, %v468
    %v479 = vpack.c.b16 %v471, %v470
    %488 = vmatprep.subr.bf16.mxu0 0
    %489 = vmatpush1.bf16.msra.mxu0 %v472
    %490 = vmatprep.subr.bf16.mxu0 0
    %491 = vmatpush1.bf16.msra.mxu0 %v473
    %492 = vmatprep.subr.bf16.mxu0 0
    %493 = vmatpush1.bf16.msra.mxu0 %v474
    %494 = vmatprep.subr.bf16.mxu0 0
    %495 = vmatpush1.bf16.msra.mxu0 %v475
    %496 = vmatprep.subr.bf16.mxu0 0
    %497 = vmatpush1.bf16.msra.mxu0 %v476
    %498 = vmatprep.subr.bf16.mxu0 0
    %499 = vmatpush1.bf16.msra.mxu0 %v477
    %500 = vmatprep.subr.bf16.mxu0 0
    %501 = vmatpush1.bf16.msra.mxu0 %v478
    %502 = vmatprep.subr.bf16.mxu0 0
    %503 = vmatpush1.bf16.msra.mxu0 %v479
    %504 = vmatprep.subr.bf16.mxu0 0
    %505 = vmatpush1.bf16.msra.mxu0 0
    %506 = vmatprep.subr.bf16.mxu0 0
    %507 = vmatpush1.bf16.msra.mxu0 0
    %508 = vmatprep.subr.bf16.mxu0 0
    %509 = vmatpush1.bf16.msra.mxu0 0
    %510 = vmatprep.subr.bf16.mxu0 0
    %511 = vmatpush1.bf16.msra.mxu0 0
    %512 = vmatprep.subr.bf16.mxu0 0
    %513 = vmatpush1.bf16.msra.mxu0 0
    %514 = vmatprep.subr.bf16.mxu0 0
    %515 = vmatpush1.bf16.msra.mxu0 0
    %516 = vmatprep.subr.bf16.mxu0 0
    %517 = vmatpush1.bf16.msra.mxu0 0
    %518 = vmatprep.subr.bf16.mxu0 0
    %519 = vmatpush1.bf16.msra.mxu0 0
    %520 = vmatprep.mubr.bf16.mxu0 0
    %521 = vmatmul.mubr.bf16.gmra.mrb[0].mxu0 %v416
    %v522 = vpop.f32.mrb[0].mxu0
    %v523 = vadd.f32 %v438, %v522
    %v524 = vpop.f32.mrb[0].mxu0
    %v525 = vpop.f32.mrb[0].mxu0
    %v526 = vpop.f32.mrb[0].mxu0
    %527 = vdwg.mxu0
    %v528 = vmax.f32 %v523, 0.0
    %v529 = vpack.c.bf16 %v528, %v528
    %v530 = vld [vmem:[#allocation11] sm:$0xf]
    %v531 = vld [vmem:[#allocation11 + $0x4] sm:$0xf]
    %v532 = vld [vmem:[#allocation11 + $0x8] sm:$0xf]
    %v533 = vld [vmem:[#allocation11 + $0xc] sm:$0xf]
    %v534 = vld [vmem:[#allocation11 + $0x10] sm:$0xf]
    %v535 = vld [vmem:[#allocation11 + $0x14] sm:$0xf]
    %v536 = vld [vmem:[#allocation11 + $0x18] sm:$0xf]
    %v537 = vld [vmem:[#allocation11 + $0x1c] sm:$0xf]
    %v538 = vld [vmem:[#allocation11 + $0x20] sm:$0xf]
    %v539 = vld [vmem:[#allocation11 + $0x24] sm:$0xf]
    %v540 = vld [vmem:[#allocation11 + $0x28] sm:$0xf]
    %v541 = vld [vmem:[#allocation11 + $0x2c] sm:$0xf]
    %v542 = vld [vmem:[#allocation11 + $0x30] sm:$0xf]
    %v543 = vld [vmem:[#allocation11 + $0x34] sm:$0xf]
    %v544 = vld [vmem:[#allocation11 + $0x38] sm:$0xf]
    %v545 = vld [vmem:[#allocation11 + $0x3c] sm:$0xf]
    %v546 = vld [vmem:[%s10] sm:$0x1]
    %v548 = vlaneseq
    %v549 = vshrl.u32 %v548, 7
    %v550 = vsub.s32 0, %v549
    %v551 = vrot.slane %v546, %v550
    %v569 = vunpack.c.l.b16 %v530
    %v570 = vunpack.c.l.b16 %v531
    %v571 = vunpack.c.l.b16 %v532
    %v572 = vunpack.c.l.b16 %v533
    %v573 = vunpack.c.l.b16 %v534
    %v574 = vunpack.c.l.b16 %v535
    %v575 = vunpack.c.l.b16 %v536
    %v576 = vunpack.c.l.b16 %v537
    %v577 = vunpack.c.l.b16 %v538
    %v578 = vunpack.c.l.b16 %v539
    %v579 = vunpack.c.l.b16 %v540
    %v580 = vunpack.c.l.b16 %v541
    %v581 = vunpack.c.l.b16 %v542
    %v582 = vunpack.c.l.b16 %v543
    %v583 = vunpack.c.l.b16 %v544
    %v584 = vunpack.c.l.b16 %v545
    %v585 = vpack.c.b16 %v570, %v569
    %v586 = vpack.c.b16 %v572, %v571
    %v587 = vpack.c.b16 %v574, %v573
    %v588 = vpack.c.b16 %v576, %v575
    %v589 = vpack.c.b16 %v578, %v577
    %v590 = vpack.c.b16 %v580, %v579
    %v591 = vpack.c.b16 %v582, %v581
    %v592 = vpack.c.b16 %v584, %v583
    %601 = vmatprep.subr.bf16.mxu0 0
    %602 = vmatpush1.bf16.msra.mxu0 %v585
    %603 = vmatprep.subr.bf16.mxu0 0
    %604 = vmatpush1.bf16.msra.mxu0 %v586
    %605 = vmatprep.subr.bf16.mxu0 0
    %606 = vmatpush1.bf16.msra.mxu0 %v587
    %607 = vmatprep.subr.bf16.mxu0 0
    %608 = vmatpush1.bf16.msra.mxu0 %v588
    %609 = vmatprep.subr.bf16.mxu0 0
    %610 = vmatpush1.bf16.msra.mxu0 %v589
    %611 = vmatprep.subr.bf16.mxu0 0
    %612 = vmatpush1.bf16.msra.mxu0 %v590
    %613 = vmatprep.subr.bf16.mxu0 0
    %614 = vmatpush1.bf16.msra.mxu0 %v591
    %615 = vmatprep.subr.bf16.mxu0 0
    %616 = vmatpush1.bf16.msra.mxu0 %v592
    %617 = vmatprep.subr.bf16.mxu0 0
    %618 = vmatpush1.bf16.msra.mxu0 0
    %619 = vmatprep.subr.bf16.mxu0 0
    %620 = vmatpush1.bf16.msra.mxu0 0
    %621 = vmatprep.subr.bf16.mxu0 0
    %622 = vmatpush1.bf16.msra.mxu0 0
    %623 = vmatprep.subr.bf16.mxu0 0
    %624 = vmatpush1.bf16.msra.mxu0 0
    %625 = vmatprep.subr.bf16.mxu0 0
    %626 = vmatpush1.bf16.msra.mxu0 0
    %627 = vmatprep.subr.bf16.mxu0 0
    %628 = vmatpush1.bf16.msra.mxu0 0
    %629 = vmatprep.subr.bf16.mxu0 0
    %630 = vmatpush1.bf16.msra.mxu0 0
    %631 = vmatprep.subr.bf16.mxu0 0
    %632 = vmatpush1.bf16.msra.mxu0 0
    %633 = vmatprep.mubr.bf16.mxu0 0
    %634 = vmatmul.mubr.bf16.gmra.mrb[0].mxu0 %v529
    %v635 = vpop.f32.mrb[0].mxu0
    %v636 = vadd.f32 %v551, %v635
    %v637 = vpop.f32.mrb[0].mxu0
    %v638 = vpop.f32.mrb[0].mxu0
    %v639 = vpop.f32.mrb[0].mxu0
    %640 = vdwg.mxu0
    %v641 = vlaneseq
    %v642 = vand.u32 %v641, 127
    %vm643 = vcmp.lt.s32.totalorder %v642, 6
    %v644 = vsel %vm643, %v636, 0.0
    %645 = vadd.xlane.f32.xlu0 %v644
    %v646 = vpop.xlane.xlu0 %645
    %v647 = vmul.f32 %v646, 0.16666667
    %vm648 = vcmp.eq.s32.totalorder %v642, 6
    %v649 = vsel %vm648, %v636, 0.0
    %650 = vadd.xlane.f32.xlu0 %v649
    %v651 = vpop.xlane.xlu0 %650
    %v652 = vsub.f32 %v636, %v647
    %v653 = vadd.f32 %v652, %v651
    %v654 = vsel %vm643, %v653, 0.0
    %655 = vst [vmem:[#allocation13] sm:$0xff] %v654
    // Predicated region
    $region70: #{tpu_custom_call.1} parent=1 // pred_check
      _
    $region71: #{tpu_custom_call.1} parent=1 // pred_check_branch
      %657 = sbr.rel (0) target = $region73
    $region72: #{tpu_custom_call.1} parent=1 // pred_region
      %s659 = ssub.s32 128, 128
      %660 = vsyncadd [#allocation4], %s659
      %s662 = sshll.u32 [#allocation13], 4
      %s663 = int_to_ptr.vmem [resolvable:$true] %s662
      %665 = dma.vmem_to_hbm [thread:$0]  %s663, 128, %s11, [#allocation4]
    $region73: #{tpu_custom_call.1} parent=1 // pred_fallthru
      _
    // Predicated region
    $region74: #{tpu_custom_call.1} parent=1 // pred_check
      _
    $region75: #{tpu_custom_call.1} parent=1 // pred_check_branch
      %667 = sbr.rel (0) target = $region77
    $region76: #{tpu_custom_call.1} parent=1 // pred_region
      %668 = dma.done [#allocation4], 128
    $region77: #{tpu_custom_call.1} parent=1 // pred_fallthru
      _
    %669 = vsyncpa [#allocation3], 1
    %670 = vsyncpa [#allocation6], 1
    %671 = vsyncpa [#allocation9], 1
    %672 = vsyncpa [#allocation12], 1
    %673 = vsyncpa [#allocation4], 1

</llo_original>
